<compile_context>
chip_gen: v5e
topology: v5e:2x2
jax: 0.10.0
libtpu: 0.0.40
codegen_flags: <defaults>
</compile_context>

<pallas_src>
import math

import jax
import jax.numpy as jnp
from jax.experimental import pallas as pl
from jax.experimental.pallas import tpu as pltpu

_LANCZOS_G = 7.0
_LANCZOS = (
    0.99999999999980993,
    676.5203681218851,
    -1259.1392167224028,
    771.32342877765313,
    -176.61502916214059,
    12.507343278686905,
    -0.13857109526572012,
    9.9843695780195716e-6,
    1.5056327351493116e-7,
)
_HALF_LOG_2PI = 0.5 * math.log(2.0 * math.pi)


def _poly_mul(p, q):
    out = [0.0] * (len(p) + len(q) - 1)
    for i, pi in enumerate(p):
        for j, qj in enumerate(q):
            out[i + j] += pi * qj
    return out


def _lanczos_rational():
    # A(z) = c0 + sum_{k=1..8} c_k / (z + k - 1)  ==  N(z) / D(z)
    # D(z) = prod_{j=0..7} (z + j)
    # N(z) = c0 * D(z) + sum_{k=1..8} c_k * prod_{j != k-1} (z + j)
    den = [1.0]
    for j in range(8):
        den = _poly_mul(den, [float(j), 1.0])          # ascending coeffs
    num = [_LANCZOS[0] * c for c in den]
    for k in range(1, 9):
        part = [1.0]
        for j in range(8):
            if j != k - 1:
                part = _poly_mul(part, [float(j), 1.0])
        for i, pi in enumerate(part):
            num[i] += _LANCZOS[k] * pi
    # Descending order for Horner evaluation.
    return tuple(reversed(num)), tuple(reversed(den))


_LG_NUM, _LG_DEN = _lanczos_rational()


def _horner(z, coeffs):
    acc = jnp.full_like(z, coeffs[0])
    for c in coeffs[1:]:
        acc = acc * z + c
    return acc


def _lgamma(z):
    # Rational Lanczos log-Gamma: one divide + one log for the series term
    # (vs. 8 per-term divides), plus log(t).  Valid for z >= 0.5 and
    # z <~ 6e4 in f32 (z**8 must not overflow); Beta concentrations here are
    # strictly positive and modest.
    # TODO(synk): reflection formula for z < 0.5 not implemented (needs sin).
    t = z + (_LANCZOS_G - 0.5)
    a = _horner(z, _LG_NUM) / _horner(z, _LG_DEN)
    return _HALF_LOG_2PI + (z - 0.5) * jnp.log(t) - t + jnp.log(a)


def _make_kernel(n_valid, n_pad, epsilon, tile_rows, lane, steps):
    inv_n = 1.0 / float(n_valid)
    chunk = tile_rows * lane
    need_mask = (n_pad != n_valid)

    def kernel(alpha_ref, beta_ref, y_ref, out_ref, acc_ref):
        p = pl.program_id(0)   # "parallel" slice (megacore on v7x)
        s = pl.program_id(1)   # "arbitrary" reduction step

        @pl.when(s == 0)
        def _():
            acc_ref[...] = jnp.zeros_like(acc_ref)

        # Inputs are DMA'd in their storage dtype; upcast on the VPU (free).
        a = alpha_ref[...].astype(jnp.float32)
        b = beta_ref[...].astype(jnp.float32)
        y = jnp.clip(y_ref[...].astype(jnp.float32), epsilon, 1.0 - epsilon)

        log_prob = ((a - 1.0) * jnp.log(y)
                    + (b - 1.0) * jnp.log(1.0 - y)
                    + _lgamma(a + b) - _lgamma(a) - _lgamma(b))

        if need_mask:
            # In-kernel validity mask (VPU compare/select) instead of a 4th
            # HBM stream; only the padded tail is affected.
            rows_i = jax.lax.broadcasted_iota(jnp.int32, (tile_rows, lane), 0)
            cols_i = jax.lax.broadcasted_iota(jnp.int32, (tile_rows, lane), 1)
            flat = (p * steps + s) * chunk + rows_i * lane + cols_i
            log_prob = jnp.where(flat < n_valid, log_prob, 0.0)

        # Pure-VPU elementwise accumulation every step; the cross-sublane
        # reduce runs only once per parallel slice, below.
        acc_ref[...] += log_prob

        @pl.when(s == steps - 1)
        def _():
            out_ref[...] = (-inv_n) * jnp.sum(acc_ref[...], axis=0,
                                              keepdims=True)

    return kernel


def beta_nll_loss(alpha, beta, y_true, epsilon=1e-6, max_tile_rows=512):
    assert alpha.shape == beta.shape == y_true.shape
    n = alpha.size
    lane = 128

    rows = pl.cdiv(n, lane)
    rows = ((rows + 7) // 8) * 8                  # sublane multiple of 8
    tile_rows = min(max_tile_rows, rows)          # (tile_rows, 128) f32 block
    tiles = pl.cdiv(rows, tile_rows)
    num_par = 2 if tiles >= 2 else 1              # split across v7x's 2 TCs
    steps = pl.cdiv(tiles, num_par)
    rows_pad = num_par * steps * tile_rows
    n_pad = rows_pad * lane

    def prep(x, fill):
        # Copy-free (metadata reshape) when n already fills whole tiles;
        # otherwise pad only the ragged tail (masked out in-kernel).
        # TODO(synk): fully copy-free ragged tail would need manual DMA.
        x = jnp.ravel(x)
        if n_pad != n:
            x = jnp.pad(x, (0, n_pad - n), constant_values=fill)
        return x.reshape(rows_pad, lane)

    a2 = prep(alpha, 1.0)     # benign fill values; tail is masked in-kernel
    b2 = prep(beta, 1.0)
    y2 = prep(y_true, 0.5)

    tile_spec = pl.BlockSpec((tile_rows, lane),
                             lambda p, s: (p * steps + s, 0))

    partials = pl.pallas_call(
        _make_kernel(n, n_pad, epsilon, tile_rows, lane, steps),
        out_shape=jax.ShapeDtypeStruct((1, num_par * lane), jnp.float32),
        grid_spec=pltpu.PrefetchScalarGridSpec(
            num_scalar_prefetch=0,
            grid=(num_par, steps),
            in_specs=[tile_spec, tile_spec, tile_spec],
            out_specs=pl.BlockSpec((1, lane), lambda p, s: (0, p)),
            scratch_shapes=[pltpu.VMEM((tile_rows, lane), jnp.float32)],
        ),
        compiler_params=pltpu.CompilerParams(
            dimension_semantics=("parallel", "arbitrary")),
    )(a2, b2, y2)

    # Per-lane / per-core partials are already scaled by -1/N; just sum.
    return jnp.sum(partials)


def _reference_loss(alpha, beta, y_true, epsilon=1e-6):
    y = jnp.clip(y_true, epsilon, 1.0 - epsilon)
    lp = ((alpha - 1.0) * jnp.log(y)
          + (beta - 1.0) * jnp.log(1.0 - y)
          + jax.lax.lgamma(alpha + beta)
          - jax.lax.lgamma(alpha)
          - jax.lax.lgamma(beta))
    return -jnp.mean(lp)


if __name__ == "__main__":
    key = jax.random.PRNGKey(0)
    k1, k2, k3 = jax.random.split(key, 3)
    shape = (2, 4, 16, 16)  # NCHW-style elementwise tensors

    alpha = jax.random.uniform(k1, shape, jnp.float32, minval=0.6, maxval=4.0)
    beta = jax.random.uniform(k2, shape, jnp.float32, minval=0.6, maxval=4.0)
    y_true = jax.random.uniform(k3, shape, jnp.float32, minval=0.0, maxval=1.0)

    nll = jax.block_until_ready(beta_nll_loss(alpha, beta, y_true))
    ref = jax.block_until_ready(_reference_loss(alpha, beta, y_true))

    assert jnp.isfinite(nll), "kernel produced non-finite result"
    assert abs(float(nll) - float(ref)) <= 1e-3 * (1.0 + abs(float(ref))), (
        float(nll), float(ref))

    print("KERNEL_OK")
</pallas_src>

<mosaic_0001>
module attributes {stable_mosaic.version = 11 : i64} {
  func.func @kernel(%arg0: i32, %arg1: i32, %arg2: memref<16x128xf32, #tpu.memory_space<vmem>>, %arg3: memref<16x128xf32, #tpu.memory_space<vmem>>, %arg4: memref<16x128xf32, #tpu.memory_space<vmem>>, %arg5: memref<1x128xf32, #tpu.memory_space<vmem>>, %arg6: memref<16x128xf32, #tpu.memory_space<vmem>>) attributes {dimension_semantics = [#tpu.dimension_semantics<parallel>, #tpu.dimension_semantics<arbitrary>], iteration_bounds = array<i64: 1, 1>, scalar_prefetch = 0 : i64, scratch_operands = 1 : i64, tpu.core_type = #tpu.core_type<tc>, window_params = [{transform_indices = @transform_0, window_bounds = array<i64: 16, 128>}, {transform_indices = @transform_1, window_bounds = array<i64: 16, 128>}, {transform_indices = @transform_2, window_bounds = array<i64: 16, 128>}, {transform_indices = @transform_3, window_bounds = array<i64: 1, 128>}]} {
    %c0_i32 = arith.constant 0 : i32
    %0 = arith.cmpi eq, %arg1, %c0_i32 : i32
    %1 = arith.extui %0 : i1 to i32
    %c0_i32_0 = arith.constant 0 : i32
    %2 = arith.cmpi ne, %1, %c0_i32_0 : i32
    scf.if %2 {
      %cst_79 = arith.constant 0.000000e+00 : f32
      %217 = vector.broadcast %cst_79 : f32 to vector<16x128xf32>
      %c0_80 = arith.constant 0 : index
      %c0_81 = arith.constant 0 : index
      %218 = vector.load %arg6[%c0_80, %c0_81] : memref<16x128xf32, #tpu.memory_space<vmem>>, vector<16x128xf32>
      tpu.vector_store %arg6[%c0_80, %c0_81], %217 {strides = array<i32>} : memref<16x128xf32, #tpu.memory_space<vmem>>, vector<16x128xf32>,
    } else {
    }
    %c0 = arith.constant 0 : index
    %c0_1 = arith.constant 0 : index
    %3 = vector.load %arg2[%c0, %c0_1] : memref<16x128xf32, #tpu.memory_space<vmem>>, vector<16x128xf32>
    %c0_2 = arith.constant 0 : index
    %c0_3 = arith.constant 0 : index
    %4 = vector.load %arg3[%c0_2, %c0_3] : memref<16x128xf32, #tpu.memory_space<vmem>>, vector<16x128xf32>
    %c0_4 = arith.constant 0 : index
    %c0_5 = arith.constant 0 : index
    %5 = vector.load %arg4[%c0_4, %c0_5] : memref<16x128xf32, #tpu.memory_space<vmem>>, vector<16x128xf32>
    %cst = arith.constant 9.99999997E-7 : f32
    %cst_6 = arith.constant 0.999998986 : f32
    %6 = vector.broadcast %cst : f32 to vector<16x128xf32>
    %7 = arith.maximumf %6, %5 : vector<16x128xf32>
    %8 = vector.broadcast %cst_6 : f32 to vector<16x128xf32>
    %9 = arith.minimumf %8, %7 : vector<16x128xf32>
    %cst_7 = arith.constant 1.000000e+00 : f32
    %10 = vector.broadcast %cst_7 : f32 to vector<16x128xf32>
    %11 = arith.subf %3, %10 : vector<16x128xf32>
    %12 = math.log %9 : vector<16x128xf32>
    %13 = arith.mulf %11, %12 : vector<16x128xf32>
    %cst_8 = arith.constant 1.000000e+00 : f32
    %14 = vector.broadcast %cst_8 : f32 to vector<16x128xf32>
    %15 = arith.subf %4, %14 : vector<16x128xf32>
    %cst_9 = arith.constant 1.000000e+00 : f32
    %16 = vector.broadcast %cst_9 : f32 to vector<16x128xf32>
    %17 = arith.subf %16, %9 : vector<16x128xf32>
    %18 = math.log %17 : vector<16x128xf32>
    %19 = arith.mulf %15, %18 : vector<16x128xf32>
    %20 = arith.addf %13, %19 : vector<16x128xf32>
    %21 = arith.addf %3, %4 : vector<16x128xf32>
    %cst_10 = arith.constant 6.500000e+00 : f32
    %22 = vector.broadcast %cst_10 : f32 to vector<16x128xf32>
    %23 = arith.addf %21, %22 : vector<16x128xf32>
    %cst_11 = arith.constant 1.000000e+00 : f32
    %24 = vector.broadcast %cst_11 : f32 to vector<16x128xf32>
    %25 = arith.mulf %24, %21 : vector<16x128xf32>
    %cst_12 = arith.constant 52.4583321 : f32
    %26 = vector.broadcast %cst_12 : f32 to vector<16x128xf32>
    %27 = arith.addf %25, %26 : vector<16x128xf32>
    %28 = arith.mulf %27, %21 : vector<16x128xf32>
    %cst_13 = arith.constant 1203.83423 : f32
    %29 = vector.broadcast %cst_13 : f32 to vector<16x128xf32>
    %30 = arith.addf %28, %29 : vector<16x128xf32>
    %31 = arith.mulf %30, %21 : vector<16x128xf32>
    %cst_14 = arith.constant 15784.8809 : f32
    %32 = vector.broadcast %cst_14 : f32 to vector<16x128xf32>
    %33 = arith.addf %31, %32 : vector<16x128xf32>
    %34 = arith.mulf %33, %21 : vector<16x128xf32>
    %cst_15 = arith.constant 129347.258 : f32
    %35 = vector.broadcast %cst_15 : f32 to vector<16x128xf32>
    %36 = arith.addf %34, %35 : vector<16x128xf32>
    %37 = arith.mulf %36, %21 : vector<16x128xf32>
    %cst_16 = arith.constant 678289.688 : f32
    %38 = vector.broadcast %cst_16 : f32 to vector<16x128xf32>
    %39 = arith.addf %37, %38 : vector<16x128xf32>
    %40 = arith.mulf %39, %21 : vector<16x128xf32>
    %cst_17 = arith.constant 2222880.5 : f32
    %41 = vector.broadcast %cst_17 : f32 to vector<16x128xf32>
    %42 = arith.addf %40, %41 : vector<16x128xf32>
    %43 = arith.mulf %42, %21 : vector<16x128xf32>
    %cst_18 = arith.constant 0x4A7E0D50 : f32
    %44 = vector.broadcast %cst_18 : f32 to vector<16x128xf32>
    %45 = arith.addf %43, %44 : vector<16x128xf32>
    %46 = arith.mulf %45, %21 : vector<16x128xf32>
    %cst_19 = arith.constant 3409662.75 : f32
    %47 = vector.broadcast %cst_19 : f32 to vector<16x128xf32>
    %48 = arith.addf %46, %47 : vector<16x128xf32>
    %cst_20 = arith.constant 1.000000e+00 : f32
    %49 = vector.broadcast %cst_20 : f32 to vector<16x128xf32>
    %50 = arith.mulf %49, %21 : vector<16x128xf32>
    %cst_21 = arith.constant 2.800000e+01 : f32
    %51 = vector.broadcast %cst_21 : f32 to vector<16x128xf32>
    %52 = arith.addf %50, %51 : vector<16x128xf32>
    %53 = arith.mulf %52, %21 : vector<16x128xf32>
    %cst_22 = arith.constant 3.220000e+02 : f32
    %54 = vector.broadcast %cst_22 : f32 to vector<16x128xf32>
    %55 = arith.addf %53, %54 : vector<16x128xf32>
    %56 = arith.mulf %55, %21 : vector<16x128xf32>
    %cst_23 = arith.constant 1.960000e+03 : f32
    %57 = vector.broadcast %cst_23 : f32 to vector<16x128xf32>
    %58 = arith.addf %56, %57 : vector<16x128xf32>
    %59 = arith.mulf %58, %21 : vector<16x128xf32>
    %cst_24 = arith.constant 6.769000e+03 : f32
    %60 = vector.broadcast %cst_24 : f32 to vector<16x128xf32>
    %61 = arith.addf %59, %60 : vector<16x128xf32>
    %62 = arith.mulf %61, %21 : vector<16x128xf32>
    %cst_25 = arith.constant 1.313200e+04 : f32
    %63 = vector.broadcast %cst_25 : f32 to vector<16x128xf32>
    %64 = arith.addf %62, %63 : vector<16x128xf32>
    %65 = arith.mulf %64, %21 : vector<16x128xf32>
    %cst_26 = arith.constant 1.306800e+04 : f32
    %66 = vector.broadcast %cst_26 : f32 to vector<16x128xf32>
    %67 = arith.addf %65, %66 : vector<16x128xf32>
    %68 = arith.mulf %67, %21 : vector<16x128xf32>
    %cst_27 = arith.constant 5.040000e+03 : f32
    %69 = vector.broadcast %cst_27 : f32 to vector<16x128xf32>
    %70 = arith.addf %68, %69 : vector<16x128xf32>
    %71 = arith.mulf %70, %21 : vector<16x128xf32>
    %cst_28 = arith.constant 0.000000e+00 : f32
    %72 = vector.broadcast %cst_28 : f32 to vector<16x128xf32>
    %73 = arith.addf %71, %72 : vector<16x128xf32>
    %74 = arith.divf %48, %73 : vector<16x128xf32>
    %cst_29 = arith.constant 5.000000e-01 : f32
    %75 = vector.broadcast %cst_29 : f32 to vector<16x128xf32>
    %76 = arith.subf %21, %75 : vector<16x128xf32>
    %77 = math.log %23 : vector<16x128xf32>
    %78 = arith.mulf %76, %77 : vector<16x128xf32>
    %cst_30 = arith.constant 0.918938517 : f32
    %79 = vector.broadcast %cst_30 : f32 to vector<16x128xf32>
    %80 = arith.addf %79, %78 : vector<16x128xf32>
    %81 = arith.subf %80, %23 : vector<16x128xf32>
    %82 = math.log %74 : vector<16x128xf32>
    %83 = arith.addf %81, %82 : vector<16x128xf32>
    %84 = arith.addf %20, %83 : vector<16x128xf32>
    %cst_31 = arith.constant 6.500000e+00 : f32
    %85 = vector.broadcast %cst_31 : f32 to vector<16x128xf32>
    %86 = arith.addf %3, %85 : vector<16x128xf32>
    %cst_32 = arith.constant 1.000000e+00 : f32
    %87 = vector.broadcast %cst_32 : f32 to vector<16x128xf32>
    %88 = arith.mulf %87, %3 : vector<16x128xf32>
    %cst_33 = arith.constant 52.4583321 : f32
    %89 = vector.broadcast %cst_33 : f32 to vector<16x128xf32>
    %90 = arith.addf %88, %89 : vector<16x128xf32>
    %91 = arith.mulf %90, %3 : vector<16x128xf32>
    %cst_34 = arith.constant 1203.83423 : f32
    %92 = vector.broadcast %cst_34 : f32 to vector<16x128xf32>
    %93 = arith.addf %91, %92 : vector<16x128xf32>
    %94 = arith.mulf %93, %3 : vector<16x128xf32>
    %cst_35 = arith.constant 15784.8809 : f32
    %95 = vector.broadcast %cst_35 : f32 to vector<16x128xf32>
    %96 = arith.addf %94, %95 : vector<16x128xf32>
    %97 = arith.mulf %96, %3 : vector<16x128xf32>
    %cst_36 = arith.constant 129347.258 : f32
    %98 = vector.broadcast %cst_36 : f32 to vector<16x128xf32>
    %99 = arith.addf %97, %98 : vector<16x128xf32>
    %100 = arith.mulf %99, %3 : vector<16x128xf32>
    %cst_37 = arith.constant 678289.688 : f32
    %101 = vector.broadcast %cst_37 : f32 to vector<16x128xf32>
    %102 = arith.addf %100, %101 : vector<16x128xf32>
    %103 = arith.mulf %102, %3 : vector<16x128xf32>
    %cst_38 = arith.constant 2222880.5 : f32
    %104 = vector.broadcast %cst_38 : f32 to vector<16x128xf32>
    %105 = arith.addf %103, %104 : vector<16x128xf32>
    %106 = arith.mulf %105, %3 : vector<16x128xf32>
    %cst_39 = arith.constant 0x4A7E0D50 : f32
    %107 = vector.broadcast %cst_39 : f32 to vector<16x128xf32>
    %108 = arith.addf %106, %107 : vector<16x128xf32>
    %109 = arith.mulf %108, %3 : vector<16x128xf32>
    %cst_40 = arith.constant 3409662.75 : f32
    %110 = vector.broadcast %cst_40 : f32 to vector<16x128xf32>
    %111 = arith.addf %109, %110 : vector<16x128xf32>
    %cst_41 = arith.constant 1.000000e+00 : f32
    %112 = vector.broadcast %cst_41 : f32 to vector<16x128xf32>
    %113 = arith.mulf %112, %3 : vector<16x128xf32>
    %cst_42 = arith.constant 2.800000e+01 : f32
    %114 = vector.broadcast %cst_42 : f32 to vector<16x128xf32>
    %115 = arith.addf %113, %114 : vector<16x128xf32>
    %116 = arith.mulf %115, %3 : vector<16x128xf32>
    %cst_43 = arith.constant 3.220000e+02 : f32
    %117 = vector.broadcast %cst_43 : f32 to vector<16x128xf32>
    %118 = arith.addf %116, %117 : vector<16x128xf32>
    %119 = arith.mulf %118, %3 : vector<16x128xf32>
    %cst_44 = arith.constant 1.960000e+03 : f32
    %120 = vector.broadcast %cst_44 : f32 to vector<16x128xf32>
    %121 = arith.addf %119, %120 : vector<16x128xf32>
    %122 = arith.mulf %121, %3 : vector<16x128xf32>
    %cst_45 = arith.constant 6.769000e+03 : f32
    %123 = vector.broadcast %cst_45 : f32 to vector<16x128xf32>
    %124 = arith.addf %122, %123 : vector<16x128xf32>
    %125 = arith.mulf %124, %3 : vector<16x128xf32>
    %cst_46 = arith.constant 1.313200e+04 : f32
    %126 = vector.broadcast %cst_46 : f32 to vector<16x128xf32>
    %127 = arith.addf %125, %126 : vector<16x128xf32>
    %128 = arith.mulf %127, %3 : vector<16x128xf32>
    %cst_47 = arith.constant 1.306800e+04 : f32
    %129 = vector.broadcast %cst_47 : f32 to vector<16x128xf32>
    %130 = arith.addf %128, %129 : vector<16x128xf32>
    %131 = arith.mulf %130, %3 : vector<16x128xf32>
    %cst_48 = arith.constant 5.040000e+03 : f32
    %132 = vector.broadcast %cst_48 : f32 to vector<16x128xf32>
    %133 = arith.addf %131, %132 : vector<16x128xf32>
    %134 = arith.mulf %133, %3 : vector<16x128xf32>
    %cst_49 = arith.constant 0.000000e+00 : f32
    %135 = vector.broadcast %cst_49 : f32 to vector<16x128xf32>
    %136 = arith.addf %134, %135 : vector<16x128xf32>
    %137 = arith.divf %111, %136 : vector<16x128xf32>
    %cst_50 = arith.constant 5.000000e-01 : f32
    %138 = vector.broadcast %cst_50 : f32 to vector<16x128xf32>
    %139 = arith.subf %3, %138 : vector<16x128xf32>
    %140 = math.log %86 : vector<16x128xf32>
    %141 = arith.mulf %139, %140 : vector<16x128xf32>
    %cst_51 = arith.constant 0.918938517 : f32
    %142 = vector.broadcast %cst_51 : f32 to vector<16x128xf32>
    %143 = arith.addf %142, %141 : vector<16x128xf32>
    %144 = arith.subf %143, %86 : vector<16x128xf32>
    %145 = math.log %137 : vector<16x128xf32>
    %146 = arith.addf %144, %145 : vector<16x128xf32>
    %147 = arith.subf %84, %146 : vector<16x128xf32>
    %cst_52 = arith.constant 6.500000e+00 : f32
    %148 = vector.broadcast %cst_52 : f32 to vector<16x128xf32>
    %149 = arith.addf %4, %148 : vector<16x128xf32>
    %cst_53 = arith.constant 1.000000e+00 : f32
    %150 = vector.broadcast %cst_53 : f32 to vector<16x128xf32>
    %151 = arith.mulf %150, %4 : vector<16x128xf32>
    %cst_54 = arith.constant 52.4583321 : f32
    %152 = vector.broadcast %cst_54 : f32 to vector<16x128xf32>
    %153 = arith.addf %151, %152 : vector<16x128xf32>
    %154 = arith.mulf %153, %4 : vector<16x128xf32>
    %cst_55 = arith.constant 1203.83423 : f32
    %155 = vector.broadcast %cst_55 : f32 to vector<16x128xf32>
    %156 = arith.addf %154, %155 : vector<16x128xf32>
    %157 = arith.mulf %156, %4 : vector<16x128xf32>
    %cst_56 = arith.constant 15784.8809 : f32
    %158 = vector.broadcast %cst_56 : f32 to vector<16x128xf32>
    %159 = arith.addf %157, %158 : vector<16x128xf32>
    %160 = arith.mulf %159, %4 : vector<16x128xf32>
    %cst_57 = arith.constant 129347.258 : f32
    %161 = vector.broadcast %cst_57 : f32 to vector<16x128xf32>
    %162 = arith.addf %160, %161 : vector<16x128xf32>
    %163 = arith.mulf %162, %4 : vector<16x128xf32>
    %cst_58 = arith.constant 678289.688 : f32
    %164 = vector.broadcast %cst_58 : f32 to vector<16x128xf32>
    %165 = arith.addf %163, %164 : vector<16x128xf32>
    %166 = arith.mulf %165, %4 : vector<16x128xf32>
    %cst_59 = arith.constant 2222880.5 : f32
    %167 = vector.broadcast %cst_59 : f32 to vector<16x128xf32>
    %168 = arith.addf %166, %167 : vector<16x128xf32>
    %169 = arith.mulf %168, %4 : vector<16x128xf32>
    %cst_60 = arith.constant 0x4A7E0D50 : f32
    %170 = vector.broadcast %cst_60 : f32 to vector<16x128xf32>
    %171 = arith.addf %169, %170 : vector<16x128xf32>
    %172 = arith.mulf %171, %4 : vector<16x128xf32>
    %cst_61 = arith.constant 3409662.75 : f32
    %173 = vector.broadcast %cst_61 : f32 to vector<16x128xf32>
    %174 = arith.addf %172, %173 : vector<16x128xf32>
    %cst_62 = arith.constant 1.000000e+00 : f32
    %175 = vector.broadcast %cst_62 : f32 to vector<16x128xf32>
    %176 = arith.mulf %175, %4 : vector<16x128xf32>
    %cst_63 = arith.constant 2.800000e+01 : f32
    %177 = vector.broadcast %cst_63 : f32 to vector<16x128xf32>
    %178 = arith.addf %176, %177 : vector<16x128xf32>
    %179 = arith.mulf %178, %4 : vector<16x128xf32>
    %cst_64 = arith.constant 3.220000e+02 : f32
    %180 = vector.broadcast %cst_64 : f32 to vector<16x128xf32>
    %181 = arith.addf %179, %180 : vector<16x128xf32>
    %182 = arith.mulf %181, %4 : vector<16x128xf32>
    %cst_65 = arith.constant 1.960000e+03 : f32
    %183 = vector.broadcast %cst_65 : f32 to vector<16x128xf32>
    %184 = arith.addf %182, %183 : vector<16x128xf32>
    %185 = arith.mulf %184, %4 : vector<16x128xf32>
    %cst_66 = arith.constant 6.769000e+03 : f32
    %186 = vector.broadcast %cst_66 : f32 to vector<16x128xf32>
    %187 = arith.addf %185, %186 : vector<16x128xf32>
    %188 = arith.mulf %187, %4 : vector<16x128xf32>
    %cst_67 = arith.constant 1.313200e+04 : f32
    %189 = vector.broadcast %cst_67 : f32 to vector<16x128xf32>
    %190 = arith.addf %188, %189 : vector<16x128xf32>
    %191 = arith.mulf %190, %4 : vector<16x128xf32>
    %cst_68 = arith.constant 1.306800e+04 : f32
    %192 = vector.broadcast %cst_68 : f32 to vector<16x128xf32>
    %193 = arith.addf %191, %192 : vector<16x128xf32>
    %194 = arith.mulf %193, %4 : vector<16x128xf32>
    %cst_69 = arith.constant 5.040000e+03 : f32
    %195 = vector.broadcast %cst_69 : f32 to vector<16x128xf32>
    %196 = arith.addf %194, %195 : vector<16x128xf32>
    %197 = arith.mulf %196, %4 : vector<16x128xf32>
    %cst_70 = arith.constant 0.000000e+00 : f32
    %198 = vector.broadcast %cst_70 : f32 to vector<16x128xf32>
    %199 = arith.addf %197, %198 : vector<16x128xf32>
    %200 = arith.divf %174, %199 : vector<16x128xf32>
    %cst_71 = arith.constant 5.000000e-01 : f32
    %201 = vector.broadcast %cst_71 : f32 to vector<16x128xf32>
    %202 = arith.subf %4, %201 : vector<16x128xf32>
    %203 = math.log %149 : vector<16x128xf32>
    %204 = arith.mulf %202, %203 : vector<16x128xf32>
    %cst_72 = arith.constant 0.918938517 : f32
    %205 = vector.broadcast %cst_72 : f32 to vector<16x128xf32>
    %206 = arith.addf %205, %204 : vector<16x128xf32>
    %207 = arith.subf %206, %149 : vector<16x128xf32>
    %208 = math.log %200 : vector<16x128xf32>
    %209 = arith.addf %207, %208 : vector<16x128xf32>
    %210 = arith.subf %147, %209 : vector<16x128xf32>
    %c0_73 = arith.constant 0 : index
    %c0_74 = arith.constant 0 : index
    %211 = vector.load %arg6[%c0_73, %c0_74] : memref<16x128xf32, #tpu.memory_space<vmem>>, vector<16x128xf32>
    %212 = arith.addf %211, %210 : vector<16x128xf32>
    %c0_75 = arith.constant 0 : index
    %c0_76 = arith.constant 0 : index
    %213 = vector.load %arg6[%c0_75, %c0_76] : memref<16x128xf32, #tpu.memory_space<vmem>>, vector<16x128xf32>
    tpu.vector_store %arg6[%c0_75, %c0_76], %212 {strides = array<i32>} : memref<16x128xf32, #tpu.memory_space<vmem>>, vector<16x128xf32>,
    %c0_i32_77 = arith.constant 0 : i32
    %214 = arith.cmpi eq, %arg1, %c0_i32_77 : i32
    %215 = arith.extui %214 : i1 to i32
    %c0_i32_78 = arith.constant 0 : i32
    %216 = arith.cmpi ne, %215, %c0_i32_78 : i32
    scf.if %216 {
      %c0_79 = arith.constant 0 : index
      %c0_80 = arith.constant 0 : index
      %217 = vector.load %arg6[%c0_79, %c0_80] : memref<16x128xf32, #tpu.memory_space<vmem>>, vector<16x128xf32>
      %cst_81 = arith.constant dense<0.000000e+00> : vector<128xf32>
      %218 = vector.multi_reduction <add>, %217, %cst_81 [0] : vector<16x128xf32> to vector<128xf32>
      %219 = vector.shape_cast %218 : vector<128xf32> to vector<1x128xf32>
      %cst_82 = arith.constant -4.8828125E-4 : f32
      %220 = vector.broadcast %cst_82 : f32 to vector<1x128xf32>
      %221 = arith.mulf %220, %219 : vector<1x128xf32>
      %c0_83 = arith.constant 0 : index
      %c0_84 = arith.constant 0 : index
      %222 = vector.load %arg5[%c0_83, %c0_84] : memref<1x128xf32, #tpu.memory_space<vmem>>, vector<1x128xf32>
      tpu.vector_store %arg5[%c0_83, %c0_84], %221 {strides = array<i32>} : memref<1x128xf32, #tpu.memory_space<vmem>>, vector<1x128xf32>,
    } else {
    }
    return
  }
  func.func @transform_0(%arg0: i32, %arg1: i32) -> (i32, i32) {
    %c1_i32 = arith.constant 1 : i32
    %0 = arith.muli %arg0, %c1_i32 : i32
    %1 = arith.addi %0, %arg1 : i32
    %c0_i32 = arith.constant 0 : i32
    %c0_i32_0 = arith.constant 0 : i32
    return %1, %c0_i32 : i32, i32
  }
  func.func @transform_1(%arg0: i32, %arg1: i32) -> (i32, i32) {
    %c1_i32 = arith.constant 1 : i32
    %0 = arith.muli %arg0, %c1_i32 : i32
    %1 = arith.addi %0, %arg1 : i32
    %c0_i32 = arith.constant 0 : i32
    %c0_i32_0 = arith.constant 0 : i32
    return %1, %c0_i32 : i32, i32
  }
  func.func @transform_2(%arg0: i32, %arg1: i32) -> (i32, i32) {
    %c1_i32 = arith.constant 1 : i32
    %0 = arith.muli %arg0, %c1_i32 : i32
    %1 = arith.addi %0, %arg1 : i32
    %c0_i32 = arith.constant 0 : i32
    %c0_i32_0 = arith.constant 0 : i32
    return %1, %c0_i32 : i32, i32
  }
  func.func @transform_3(%arg0: i32, %arg1: i32) -> (i32, i32) {
    %c0_i32 = arith.constant 0 : i32
    %c0_i32_0 = arith.constant 0 : i32
    return %c0_i32, %arg0 : i32, i32
  }
}

</mosaic_0001>

<llo_original>
// kernel: tpu_custom_call.1
$region0: #{tpu_custom_call.1}
  #allocation0 [shape = 'u32[]', space=smem, size = 0x4, offset = 0x4, fixed_abs, tag = 'smem constant byte address 0x4 - core index']
  #allocation1 [shape = 'u32[72,128]{1,0:T(1,128)}', space=vmem, size = 0x9000, scoped, tag = 'internal scratch']
  #allocation2 [shape = 'f32[16,128]{1,0:T(8,128)}', space=vmem, size = 0x2000, scoped, tag = 'scratch operand']
  %s0 = inlined_call_operand.hbm [shape: f32[16,128], index: 0, kind: input, shape index: {}]
  %s1 = inlined_call_operand.hbm [shape: f32[16,128], index: 1, kind: input, shape index: {}]
  %s2 = inlined_call_operand.hbm [shape: f32[16,128], index: 2, kind: input, shape index: {}]
  %s3 = inlined_call_operand.hbm [shape: f32[1,128], index: 3, kind: output, shape index: {}]
  %s4 = sld [smem:[#allocation0]]
  $region42: #{tpu_custom_call.1} parent=0
    _
  %s6 = ssub.s32 1, %s4
  %s7 = scalar_select 0, %s6, %s4
  $region1: #{tpu_custom_call.1} parent=0
    #allocation3 [shape = 'u8[8192]{0}', space=vmem, size = 0x2000, scoped, tag = 'input window, operand 0, single buffered']
    #allocation4 [shape = 's32[1]{0}', space=sflag, size = 0x4, scoped, tag = 'scoped memory for tpu_custom_call.1']
    #allocation5 [shape = 's32[1]{0}', space=sflag, size = 0x4, scoped, tag = 'scoped memory for tpu_custom_call.1']
    #allocation6 [shape = 'u8[8192]{0}', space=vmem, size = 0x2000, scoped, tag = 'input window, operand 1, single buffered']
    #allocation7 [shape = 's32[1]{0}', space=sflag, size = 0x4, scoped, tag = 'scoped memory for tpu_custom_call.1']
    #allocation8 [shape = 'u8[8192]{0}', space=vmem, size = 0x2000, scoped, tag = 'input window, operand 2, single buffered']
    #allocation9 [shape = 'u8[512]{0}', space=vmem, size = 0x400, scoped, tag = 'output window, operand 0, single buffered']
    %8 = vsyncpa [#allocation4], 0
    %9 = vsyncpa [#allocation7], 0
    %10 = vsyncpa [#allocation5], 0
    // Predicated region
    $region2: #{tpu_custom_call.1} parent=1 // pred_check
      _
    $region3: #{tpu_custom_call.1} parent=1 // pred_check_branch
      %12 = sbr.rel (0) target = $region5
    $region4: #{tpu_custom_call.1} parent=1 // pred_region
      %s13 = sadd.s32 0, 0
      %s14 = smul.u32 2, %s13
      %16 = vsyncadd [#allocation4], 0
      %s17 = smul.addr %s14, 8
      %s18 = scalar_lea.hbm %s0, %s17
      %s19 = sshll.u32 %s18, 4
      %s20 = int_to_ptr.hbm [resolvable:$true] %s19
      %s21 = sshll.u32 [#allocation3], 4
      %s22 = int_to_ptr.vmem [resolvable:$true] %s21
      %27 = dma.hbm_to_vmem [thread:$0]  %s20, 256, %s22, [#allocation4], 128, 128, 8
    $region5: #{tpu_custom_call.1} parent=1 // pred_fallthru
      _
    // Predicated region
    $region6: #{tpu_custom_call.1} parent=1 // pred_check
      _
    $region7: #{tpu_custom_call.1} parent=1 // pred_check_branch
      %29 = sbr.rel (0) target = $region9
    $region8: #{tpu_custom_call.1} parent=1 // pred_region
      %s30 = sadd.s32 0, 0
      %s31 = smul.u32 2, %s30
      %33 = vsyncadd [#allocation7], 0
      %s34 = smul.addr %s31, 8
      %s35 = scalar_lea.hbm %s1, %s34
      %s36 = sshll.u32 %s35, 4
      %s37 = int_to_ptr.hbm [resolvable:$true] %s36
      %s38 = sshll.u32 [#allocation6], 4
      %s39 = int_to_ptr.vmem [resolvable:$true] %s38
      %44 = dma.hbm_to_vmem [thread:$0]  %s37, 256, %s39, [#allocation7], 128, 128, 8
    $region9: #{tpu_custom_call.1} parent=1 // pred_fallthru
      _
    // Predicated region
    $region10: #{tpu_custom_call.1} parent=1 // pred_check
      _
    $region11: #{tpu_custom_call.1} parent=1 // pred_check_branch
      %46 = sbr.rel (0) target = $region13
    $region12: #{tpu_custom_call.1} parent=1 // pred_region
      %s47 = sadd.s32 0, 0
      %s48 = smul.u32 2, %s47
      %50 = vsyncadd [#allocation7], 0
      %s51 = smul.addr %s48, 8
      %s52 = scalar_lea.hbm %s2, %s51
      %s53 = sshll.u32 %s52, 4
      %s54 = int_to_ptr.hbm [resolvable:$true] %s53
      %s55 = sshll.u32 [#allocation8], 4
      %s56 = int_to_ptr.vmem [resolvable:$true] %s55
      %61 = dma.hbm_to_vmem [thread:$0]  %s54, 256, %s56, [#allocation7], 128, 128, 8
    $region13: #{tpu_custom_call.1} parent=1 // pred_fallthru
      _
    // Predicated region
    $region14: #{tpu_custom_call.1} parent=1 // pred_check
      _
    $region15: #{tpu_custom_call.1} parent=1 // pred_check_branch
      %63 = sbr.rel (0) target = $region17
    $region16: #{tpu_custom_call.1} parent=1 // pred_region
      %65 = dma.done [#allocation4], 256
    $region17: #{tpu_custom_call.1} parent=1 // pred_fallthru
      _
    // Predicated region
    $region18: #{tpu_custom_call.1} parent=1 // pred_check
      _
    $region19: #{tpu_custom_call.1} parent=1 // pred_check_branch
      %67 = sbr.rel (0) target = $region21
    $region20: #{tpu_custom_call.1} parent=1 // pred_region
      %69 = dma.done [#allocation7], 256
    $region21: #{tpu_custom_call.1} parent=1 // pred_fallthru
      _
    // Predicated region
    $region22: #{tpu_custom_call.1} parent=1 // pred_check
      _
    $region23: #{tpu_custom_call.1} parent=1 // pred_check_branch
      %71 = sbr.rel (0) target = $region25
    $region24: #{tpu_custom_call.1} parent=1 // pred_region
      %73 = dma.done [#allocation7], 256
    $region25: #{tpu_custom_call.1} parent=1 // pred_fallthru
      _
    %s74 = sadd.s32 0, 0
    %s75 = smul.u32 2, %s74
    %s76 = sadd.s32 0, 0
    %s77 = smul.u32 2, %s76
    %s78 = sadd.s32 0, 0
    %s79 = smul.u32 2, %s78
    %p80 = scmp.eq.s32.totalorder 0, 0
    // Predicated region
    $region26: #{tpu_custom_call.1} parent=1 // pred_check
      %p81 = pneg %p80
    $region27: #{tpu_custom_call.1} parent=1 // pred_check_branch
      %83 = sbr.rel (%p81) target = $region29
    $region28: #{tpu_custom_call.1} parent=1 // pred_region
      %84 = vst [vmem:[#allocation2] sm:$0xff] 0.0
      %85 = vst [vmem:[#allocation2 + $0x8] sm:$0xff] 0.0
    $region29: #{tpu_custom_call.1} parent=1 // pred_fallthru
      _
    %v86 = vld [vmem:[#allocation3] sm:$0xff]
    %v87 = vld [vmem:[#allocation3 + $0x8] sm:$0xff]
    %v88 = vld [vmem:[#allocation6] sm:$0xff]
    %v89 = vld [vmem:[#allocation6 + $0x8] sm:$0xff]
    %v90 = vld [vmem:[#allocation8] sm:$0xff]
    %v91 = vld [vmem:[#allocation8 + $0x8] sm:$0xff]
    %v92 = vmax.f32 %v90, 1e-06
    %v93 = vmax.f32 %v91, 1e-06
    %v94 = vmin.f32 %v92, 0.999999
    %v95 = vmin.f32 %v93, 0.999999
    %v96 = vsub.f32 %v86, 1.0
    %v97 = vsub.f32 %v87, 1.0
    %v98 = vlog2.pop %v94
    %v99 = vmul.f32 %v98, 0.6931472
    %v100 = vlog2.pop %v95
    %v101 = vmul.f32 %v100, 0.6931472
    %v102 = vmul.f32 %v96, %v99
    %v103 = vmul.f32 %v97, %v101
    %v104 = vsub.f32 %v88, 1.0
    %v105 = vsub.f32 %v89, 1.0
    %v106 = vsub.f32 1.0, %v94
    %v107 = vsub.f32 1.0, %v95
    %v108 = vlog2.pop %v106
    %v109 = vmul.f32 %v108, 0.6931472
    %v110 = vlog2.pop %v107
    %v111 = vmul.f32 %v110, 0.6931472
    %v112 = vmul.f32 %v104, %v109
    %v113 = vmul.f32 %v105, %v111
    %v114 = vadd.f32 %v102, %v112
    %v115 = vadd.f32 %v103, %v113
    %v116 = vadd.f32 %v86, %v88
    %v117 = vadd.f32 %v87, %v89
    %v118 = vadd.f32 %v116, 6.5
    %v119 = vadd.f32 %v117, 6.5
    %v120 = vadd.f32 %v116, 52.458332
    %v121 = vadd.f32 %v117, 52.458332
    %v122 = vmul.f32 %v120, %v116
    %v123 = vmul.f32 %v121, %v117
    %v124 = vadd.f32 %v122, 1203.8342
    %v125 = vadd.f32 %v123, 1203.8342
    %v126 = vmul.f32 %v124, %v116
    %v127 = vmul.f32 %v125, %v117
    %v128 = vadd.f32 %v126, 15784.881
    %v129 = vadd.f32 %v127, 15784.881
    %v130 = vmul.f32 %v128, %v116
    %v131 = vmul.f32 %v129, %v117
    %v132 = vadd.f32 %v130, 129347.26
    %v133 = vadd.f32 %v131, 129347.26
    %v134 = vmul.f32 %v132, %v116
    %v135 = vmul.f32 %v133, %v117
    %v136 = vadd.f32 %v134, 678289.7
    %v137 = vadd.f32 %v135, 678289.7
    %v138 = vmul.f32 %v136, %v116
    %v139 = vmul.f32 %v137, %v117
    %v140 = vadd.f32 %v138, 2222880.5
    %v141 = vadd.f32 %v139, 2222880.5
    %v142 = vmul.f32 %v140, %v116
    %v143 = vmul.f32 %v141, %v117
    %v144 = vadd.f32 %v142, 4162388.0
    %v145 = vadd.f32 %v143, 4162388.0
    %v146 = vmul.f32 %v144, %v116
    %v147 = vmul.f32 %v145, %v117
    %v148 = vadd.f32 %v146, 3409662.8
    %v149 = vadd.f32 %v147, 3409662.8
    %v150 = vadd.f32 %v116, 28.0
    %v151 = vadd.f32 %v117, 28.0
    %v152 = vmul.f32 %v150, %v116
    %v153 = vmul.f32 %v151, %v117
    %v154 = vadd.f32 %v152, 322.0
    %v155 = vadd.f32 %v153, 322.0
    %v156 = vmul.f32 %v154, %v116
    %v157 = vmul.f32 %v155, %v117
    %v158 = vadd.f32 %v156, 1960.0
    %v159 = vadd.f32 %v157, 1960.0
    %v160 = vmul.f32 %v158, %v116
    %v161 = vmul.f32 %v159, %v117
    %v162 = vadd.f32 %v160, 6769.0
    %v163 = vadd.f32 %v161, 6769.0
    %v164 = vmul.f32 %v162, %v116
    %v165 = vmul.f32 %v163, %v117
    %v166 = vadd.f32 %v164, 13132.0
    %v167 = vadd.f32 %v165, 13132.0
    %v168 = vmul.f32 %v166, %v116
    %v169 = vmul.f32 %v167, %v117
    %v170 = vadd.f32 %v168, 13068.0
    %v171 = vadd.f32 %v169, 13068.0
    %v172 = vmul.f32 %v170, %v116
    %v173 = vmul.f32 %v171, %v117
    %v174 = vadd.f32 %v172, 5040.0
    %v175 = vadd.f32 %v173, 5040.0
    %v176 = vmul.f32 %v174, %v116
    %v177 = vmul.f32 %v175, %v117
    %v178 = vadd.f32 %v176, 0.0
    %v179 = vadd.f32 %v177, 0.0
    %v180 = vrcp.pop %v178
    %v181 = vmul.f32 %v178, %v180
    %v182 = vsub.f32 1.0, %v181
    %v183 = vmul.f32 %v180, %v182
    %v184 = vadd.f32 %v180, %v183
    %vm185 = vweird.f32 %v178
    %vm186 = vweird.f32 %v180
    %vm187 = vmor %vm185, %vm186
    %v188 = vsel %vm187, %v180, %v184
    %v189 = vand.u32 2147483647, %v178
    %vm190 = vcmp.eq.f32.partialorder %v189, 8.507059e+37
    %v191 = vand.u32 %v178, 2147483648
    %v192 = vor.u32 1.1754944e-38, %v191
    %v193 = vsel %vm190, %v192, %v188
    %v194 = vmul.f32 %v148, %v193
    %v195 = vrcp.pop %v179
    %v196 = vmul.f32 %v179, %v195
    %v197 = vsub.f32 1.0, %v196
    %v198 = vmul.f32 %v195, %v197
    %v199 = vadd.f32 %v195, %v198
    %vm200 = vweird.f32 %v179
    %vm201 = vweird.f32 %v195
    %vm202 = vmor %vm200, %vm201
    %v203 = vsel %vm202, %v195, %v199
    %v204 = vand.u32 2147483647, %v179
    %vm205 = vcmp.eq.f32.partialorder %v204, 8.507059e+37
    %v206 = vand.u32 %v179, 2147483648
    %v207 = vor.u32 1.1754944e-38, %v206
    %v208 = vsel %vm205, %v207, %v203
    %v209 = vmul.f32 %v149, %v208
    %v210 = vsub.f32 %v116, 0.5
    %v211 = vsub.f32 %v117, 0.5
    %v212 = vlog2.pop %v118
    %v213 = vmul.f32 %v212, 0.6931472
    %v214 = vlog2.pop %v119
    %v215 = vmul.f32 %v214, 0.6931472
    %v216 = vmul.f32 %v210, %v213
    %v217 = vmul.f32 %v211, %v215
    %v218 = vadd.f32 %v216, 0.9189385
    %v219 = vadd.f32 %v217, 0.9189385
    %v220 = vsub.f32 %v218, %v118
    %v221 = vsub.f32 %v219, %v119
    %v222 = vlog2.pop %v194
    %v223 = vmul.f32 %v222, 0.6931472
    %v224 = vlog2.pop %v209
    %v225 = vmul.f32 %v224, 0.6931472
    %v226 = vadd.f32 %v220, %v223
    %v227 = vadd.f32 %v221, %v225
    %v228 = vadd.f32 %v114, %v226
    %v229 = vadd.f32 %v115, %v227
    %v230 = vadd.f32 %v86, 6.5
    %v231 = vadd.f32 %v87, 6.5
    %v232 = vadd.f32 %v86, 52.458332
    %v233 = vadd.f32 %v87, 52.458332
    %v234 = vmul.f32 %v232, %v86
    %v235 = vmul.f32 %v233, %v87
    %v236 = vadd.f32 %v234, 1203.8342
    %v237 = vadd.f32 %v235, 1203.8342
    %v238 = vmul.f32 %v236, %v86
    %v239 = vmul.f32 %v237, %v87
    %v240 = vadd.f32 %v238, 15784.881
    %v241 = vadd.f32 %v239, 15784.881
    %v242 = vmul.f32 %v240, %v86
    %v243 = vmul.f32 %v241, %v87
    %v244 = vadd.f32 %v242, 129347.26
    %v245 = vadd.f32 %v243, 129347.26
    %v246 = vmul.f32 %v244, %v86
    %v247 = vmul.f32 %v245, %v87
    %v248 = vadd.f32 %v246, 678289.7
    %v249 = vadd.f32 %v247, 678289.7
    %v250 = vmul.f32 %v248, %v86
    %v251 = vmul.f32 %v249, %v87
    %v252 = vadd.f32 %v250, 2222880.5
    %v253 = vadd.f32 %v251, 2222880.5
    %v254 = vmul.f32 %v252, %v86
    %v255 = vmul.f32 %v253, %v87
    %v256 = vadd.f32 %v254, 4162388.0
    %v257 = vadd.f32 %v255, 4162388.0
    %v258 = vmul.f32 %v256, %v86
    %v259 = vmul.f32 %v257, %v87
    %v260 = vadd.f32 %v258, 3409662.8
    %v261 = vadd.f32 %v259, 3409662.8
    %v262 = vadd.f32 %v86, 28.0
    %v263 = vadd.f32 %v87, 28.0
    %v264 = vmul.f32 %v262, %v86
    %v265 = vmul.f32 %v263, %v87
    %v266 = vadd.f32 %v264, 322.0
    %v267 = vadd.f32 %v265, 322.0
    %v268 = vmul.f32 %v266, %v86
    %v269 = vmul.f32 %v267, %v87
    %v270 = vadd.f32 %v268, 1960.0
    %v271 = vadd.f32 %v269, 1960.0
    %v272 = vmul.f32 %v270, %v86
    %v273 = vmul.f32 %v271, %v87
    %v274 = vadd.f32 %v272, 6769.0
    %v275 = vadd.f32 %v273, 6769.0
    %v276 = vmul.f32 %v274, %v86
    %v277 = vmul.f32 %v275, %v87
    %v278 = vadd.f32 %v276, 13132.0
    %v279 = vadd.f32 %v277, 13132.0
    %v280 = vmul.f32 %v278, %v86
    %v281 = vmul.f32 %v279, %v87
    %v282 = vadd.f32 %v280, 13068.0
    %v283 = vadd.f32 %v281, 13068.0
    %v284 = vmul.f32 %v282, %v86
    %v285 = vmul.f32 %v283, %v87
    %v286 = vadd.f32 %v284, 5040.0
    %v287 = vadd.f32 %v285, 5040.0
    %v288 = vmul.f32 %v286, %v86
    %v289 = vmul.f32 %v287, %v87
    %v290 = vadd.f32 %v288, 0.0
    %v291 = vadd.f32 %v289, 0.0
    %v292 = vrcp.pop %v290
    %v293 = vmul.f32 %v290, %v292
    %v294 = vsub.f32 1.0, %v293
    %v295 = vmul.f32 %v292, %v294
    %v296 = vadd.f32 %v292, %v295
    %vm297 = vweird.f32 %v290
    %vm298 = vweird.f32 %v292
    %vm299 = vmor %vm297, %vm298
    %v300 = vsel %vm299, %v292, %v296
    %v301 = vand.u32 2147483647, %v290
    %vm302 = vcmp.eq.f32.partialorder %v301, 8.507059e+37
    %v303 = vand.u32 %v290, 2147483648
    %v304 = vor.u32 1.1754944e-38, %v303
    %v305 = vsel %vm302, %v304, %v300
    %v306 = vmul.f32 %v260, %v305
    %v307 = vrcp.pop %v291
    %v308 = vmul.f32 %v291, %v307
    %v309 = vsub.f32 1.0, %v308
    %v310 = vmul.f32 %v307, %v309
    %v311 = vadd.f32 %v307, %v310
    %vm312 = vweird.f32 %v291
    %vm313 = vweird.f32 %v307
    %vm314 = vmor %vm312, %vm313
    %v315 = vsel %vm314, %v307, %v311
    %v316 = vand.u32 2147483647, %v291
    %vm317 = vcmp.eq.f32.partialorder %v316, 8.507059e+37
    %v318 = vand.u32 %v291, 2147483648
    %v319 = vor.u32 1.1754944e-38, %v318
    %v320 = vsel %vm317, %v319, %v315
    %v321 = vmul.f32 %v261, %v320
    %v322 = vsub.f32 %v86, 0.5
    %v323 = vsub.f32 %v87, 0.5
    %v324 = vlog2.pop %v230
    %v325 = vmul.f32 %v324, 0.6931472
    %v326 = vlog2.pop %v231
    %v327 = vmul.f32 %v326, 0.6931472
    %v328 = vmul.f32 %v322, %v325
    %v329 = vmul.f32 %v323, %v327
    %v330 = vadd.f32 %v328, 0.9189385
    %v331 = vadd.f32 %v329, 0.9189385
    %v332 = vsub.f32 %v330, %v230
    %v333 = vsub.f32 %v331, %v231
    %v334 = vlog2.pop %v306
    %v335 = vmul.f32 %v334, 0.6931472
    %v336 = vlog2.pop %v321
    %v337 = vmul.f32 %v336, 0.6931472
    %v338 = vadd.f32 %v332, %v335
    %v339 = vadd.f32 %v333, %v337
    %v340 = vsub.f32 %v228, %v338
    %v341 = vsub.f32 %v229, %v339
    %v342 = vadd.f32 %v88, 6.5
    %v343 = vadd.f32 %v89, 6.5
    %v344 = vadd.f32 %v88, 52.458332
    %v345 = vadd.f32 %v89, 52.458332
    %v346 = vmul.f32 %v344, %v88
    %v347 = vmul.f32 %v345, %v89
    %v348 = vadd.f32 %v346, 1203.8342
    %v349 = vadd.f32 %v347, 1203.8342
    %v350 = vmul.f32 %v348, %v88
    %v351 = vmul.f32 %v349, %v89
    %v352 = vadd.f32 %v350, 15784.881
    %v353 = vadd.f32 %v351, 15784.881
    %v354 = vmul.f32 %v352, %v88
    %v355 = vmul.f32 %v353, %v89
    %v356 = vadd.f32 %v354, 129347.26
    %v357 = vadd.f32 %v355, 129347.26
    %v358 = vmul.f32 %v356, %v88
    %v359 = vmul.f32 %v357, %v89
    %v360 = vadd.f32 %v358, 678289.7
    %v361 = vadd.f32 %v359, 678289.7
    %v362 = vmul.f32 %v360, %v88
    %v363 = vmul.f32 %v361, %v89
    %v364 = vadd.f32 %v362, 2222880.5
    %v365 = vadd.f32 %v363, 2222880.5
    %v366 = vmul.f32 %v364, %v88
    %v367 = vmul.f32 %v365, %v89
    %v368 = vadd.f32 %v366, 4162388.0
    %v369 = vadd.f32 %v367, 4162388.0
    %v370 = vmul.f32 %v368, %v88
    %v371 = vmul.f32 %v369, %v89
    %v372 = vadd.f32 %v370, 3409662.8
    %v373 = vadd.f32 %v371, 3409662.8
    %v374 = vadd.f32 %v88, 28.0
    %v375 = vadd.f32 %v89, 28.0
    %v376 = vmul.f32 %v374, %v88
    %v377 = vmul.f32 %v375, %v89
    %v378 = vadd.f32 %v376, 322.0
    %v379 = vadd.f32 %v377, 322.0
    %v380 = vmul.f32 %v378, %v88
    %v381 = vmul.f32 %v379, %v89
    %v382 = vadd.f32 %v380, 1960.0
    %v383 = vadd.f32 %v381, 1960.0
    %v384 = vmul.f32 %v382, %v88
    %v385 = vmul.f32 %v383, %v89
    %v386 = vadd.f32 %v384, 6769.0
    %v387 = vadd.f32 %v385, 6769.0
    %v388 = vmul.f32 %v386, %v88
    %v389 = vmul.f32 %v387, %v89
    %v390 = vadd.f32 %v388, 13132.0
    %v391 = vadd.f32 %v389, 13132.0
    %v392 = vmul.f32 %v390, %v88
    %v393 = vmul.f32 %v391, %v89
    %v394 = vadd.f32 %v392, 13068.0
    %v395 = vadd.f32 %v393, 13068.0
    %v396 = vmul.f32 %v394, %v88
    %v397 = vmul.f32 %v395, %v89
    %v398 = vadd.f32 %v396, 5040.0
    %v399 = vadd.f32 %v397, 5040.0
    %v400 = vmul.f32 %v398, %v88
    %v401 = vmul.f32 %v399, %v89
    %v402 = vadd.f32 %v400, 0.0
    %v403 = vadd.f32 %v401, 0.0
    %v404 = vrcp.pop %v402
    %v405 = vmul.f32 %v402, %v404
    %v406 = vsub.f32 1.0, %v405
    %v407 = vmul.f32 %v404, %v406
    %v408 = vadd.f32 %v404, %v407
    %vm409 = vweird.f32 %v402
    %vm410 = vweird.f32 %v404
    %vm411 = vmor %vm409, %vm410
    %v412 = vsel %vm411, %v404, %v408
    %v413 = vand.u32 2147483647, %v402
    %vm414 = vcmp.eq.f32.partialorder %v413, 8.507059e+37
    %v415 = vand.u32 %v402, 2147483648
    %v416 = vor.u32 1.1754944e-38, %v415
    %v417 = vsel %vm414, %v416, %v412
    %v418 = vmul.f32 %v372, %v417
    %v419 = vrcp.pop %v403
    %v420 = vmul.f32 %v403, %v419
    %v421 = vsub.f32 1.0, %v420
    %v422 = vmul.f32 %v419, %v421
    %v423 = vadd.f32 %v419, %v422
    %vm424 = vweird.f32 %v403
    %vm425 = vweird.f32 %v419
    %vm426 = vmor %vm424, %vm425
    %v427 = vsel %vm426, %v419, %v423
    %v428 = vand.u32 2147483647, %v403
    %vm429 = vcmp.eq.f32.partialorder %v428, 8.507059e+37
    %v430 = vand.u32 %v403, 2147483648
    %v431 = vor.u32 1.1754944e-38, %v430
    %v432 = vsel %vm429, %v431, %v427
    %v433 = vmul.f32 %v373, %v432
    %v434 = vsub.f32 %v88, 0.5
    %v435 = vsub.f32 %v89, 0.5
    %v436 = vlog2.pop %v342
    %v437 = vmul.f32 %v436, 0.6931472
    %v438 = vlog2.pop %v343
    %v439 = vmul.f32 %v438, 0.6931472
    %v440 = vmul.f32 %v434, %v437
    %v441 = vmul.f32 %v435, %v439
    %v442 = vadd.f32 %v440, 0.9189385
    %v443 = vadd.f32 %v441, 0.9189385
    %v444 = vsub.f32 %v442, %v342
    %v445 = vsub.f32 %v443, %v343
    %v446 = vlog2.pop %v418
    %v447 = vmul.f32 %v446, 0.6931472
    %v448 = vlog2.pop %v433
    %v449 = vmul.f32 %v448, 0.6931472
    %v450 = vadd.f32 %v444, %v447
    %v451 = vadd.f32 %v445, %v449
    %v452 = vsub.f32 %v340, %v450
    %v453 = vsub.f32 %v341, %v451
    %v454 = vld [vmem:[#allocation2] sm:$0xff]
    %v455 = vld [vmem:[#allocation2 + $0x8] sm:$0xff]
    %v456 = vadd.f32 %v454, %v452
    %v457 = vadd.f32 %v455, %v453
    %458 = vst [vmem:[#allocation2] sm:$0xff] %v456
    %459 = vst [vmem:[#allocation2 + $0x8] sm:$0xff] %v457
    // Predicated region
    $region30: #{tpu_custom_call.1} parent=1 // pred_check
      %p460 = pneg %p80
    $region31: #{tpu_custom_call.1} parent=1 // pred_check_branch
      %462 = sbr.rel (%p460) target = $region33
    $region32: #{tpu_custom_call.1} parent=1 // pred_region
      %v463 = vld [vmem:[#allocation2] sm:$0xff]
      %v464 = vld [vmem:[#allocation2 + $0x8] sm:$0xff]
      %v465 = vadd.f32 %v463, %v464
      %v466 = vrot.slane %v465, 4
      %v467 = vadd.f32 %v465, %v466
      %v468 = vrot.slane %v467, 2
      %v469 = vadd.f32 %v467, %v468
      %v470 = vrot.slane %v469, 1
      %v471 = vadd.f32 %v469, %v470
      %v472 = vmul.f32 %v471, -0.00048828125
      %473 = vst [vmem:[#allocation9] sm:$0x1] %v472
    $region33: #{tpu_custom_call.1} parent=1 // pred_fallthru
      _
    // Predicated region
    $region34: #{tpu_custom_call.1} parent=1 // pred_check
      _
    $region35: #{tpu_custom_call.1} parent=1 // pred_check_branch
      %475 = sbr.rel (0) target = $region37
    $region36: #{tpu_custom_call.1} parent=1 // pred_region
      %477 = vsyncadd [#allocation5], 0
      %s479 = sshll.u32 [#allocation9], 4
      %s480 = int_to_ptr.vmem [resolvable:$true] %s479
      %s481 = sshll.u32 %s3, 4
      %s482 = int_to_ptr.hbm [resolvable:$true] %s481
      %484 = dma.vmem_to_hbm [thread:$0]  %s480, 16, %s482, [#allocation5]
    $region37: #{tpu_custom_call.1} parent=1 // pred_fallthru
      _
    // Predicated region
    $region38: #{tpu_custom_call.1} parent=1 // pred_check
      _
    $region39: #{tpu_custom_call.1} parent=1 // pred_check_branch
      %486 = sbr.rel (0) target = $region41
    $region40: #{tpu_custom_call.1} parent=1 // pred_region
      %488 = dma.done [#allocation5], 16
    $region41: #{tpu_custom_call.1} parent=1 // pred_fallthru
      _
    %489 = vsyncpa [#allocation4], 1
    %490 = vsyncpa [#allocation7], 1
    %491 = vsyncpa [#allocation5], 1

</llo_original>
